<compile_context>
chip_gen: v6e
topology: v6e:2x2x1
jax: 0.10.0
libtpu: 0.0.40
codegen_flags: <defaults>
</compile_context>

<pallas_src>
import functools
import jax
import jax.numpy as jnp
from jax.experimental import pallas as pl
from jax.experimental.pallas import tpu as pltpu

# ---- bert-base-like config (shrunk layer count / vocab for a small synthetic test) ----
HIDDEN = 768           # linear in-dim must be 768 per the module
N_HEADS = 12
HEAD_DIM = HIDDEN // N_HEADS
INTERMEDIATE = 3072
N_LAYERS = 2           # TODO(synk): real bert-base-uncased has 12 layers; this only changes loop count.
VOCAB = 1000
MAX_POS = 64
LN_EPS = 1e-12
NUM_CLASSES = 4
PAD_CLASSES = 128      # lane-dense classifier output; real logits sliced in JAX afterwards.


def _pick_tile(dim, candidates):
    """Largest candidate that evenly divides `dim`; else the full extent (always legal)."""
    for c in candidates:
        if dim % c == 0:
            return c
    return dim


# ---------------------------- Pallas kernels ----------------------------

def _dense_kernel(x_ref, w_ref, b_ref, o_ref, acc_ref, *, activation):
    """(tm, tn) output tile; K-tiled accumulation in f32; bias + activation epilogue in f32."""
    k = pl.program_id(2)

    @pl.when(k == 0)
    def _():
        acc_ref[...] = jnp.zeros_like(acc_ref)

    acc_ref[...] += jnp.dot(x_ref[...], w_ref[...], preferred_element_type=jnp.float32)

    @pl.when(k == pl.num_programs(2) - 1)
    def _():
        out = acc_ref[...] + b_ref[...]
        if activation == "gelu":
            # TODO(synk): HF BERT uses exact erf GELU; tanh approximation used here.
            out = 0.5 * out * (1.0 + jnp.tanh(0.7978845608028654 * (out + 0.044715 * out * out * out)))
        elif activation == "tanh":
            out = jnp.tanh(out)
        o_ref[...] = out.astype(o_ref.dtype)


def dense(x, w, b, activation=None, out_dtype=jnp.bfloat16):
    """y = act(x @ w + b).  bf16 operands on the MXU, f32 accumulator, tiled over M/N/K."""
    M, K = x.shape
    Kw, N = w.shape
    assert K == Kw
    x = x.astype(jnp.bfloat16)
    w = w.astype(jnp.bfloat16)
    b = b.astype(jnp.float32).reshape(1, N)

    tm = _pick_tile(M, (256, 128, 64, 32, 16, 8))
    tn = _pick_tile(N, (768, 512, 384, 256, 128))   # multiples of 128 (v5e lane alignment)
    tk = _pick_tile(K, (512, 384, 256, 128))

    return pl.pallas_call(
        functools.partial(_dense_kernel, activation=activation),
        out_shape=jax.ShapeDtypeStruct((M, N), out_dtype),
        grid_spec=pltpu.PrefetchScalarGridSpec(
            num_scalar_prefetch=0,
            grid=(M // tm, N // tn, K // tk),          # reduction axis last
            in_specs=[
                pl.BlockSpec((tm, tk), lambda i, j, k: (i, k)),
                pl.BlockSpec((tk, tn), lambda i, j, k: (k, j)),
                pl.BlockSpec((1, tn), lambda i, j, k: (0, j)),
            ],
            out_specs=pl.BlockSpec((tm, tn), lambda i, j, k: (i, j)),
            scratch_shapes=[pltpu.VMEM((tm, tn), jnp.float32)],
        ),
        compiler_params=pltpu.CompilerParams(
            dimension_semantics=("parallel", "parallel", "arbitrary")),
    )(x, w, b)


def _attn_kernel(qkv_ref, mb_ref, o_ref, *, scale, n_heads, head_dim):
    """One batch element per grid step: all heads split via static lane slices of the
    fused (L, 3H) QKV block; per-head masked softmax in f32; single lane-dense store."""
    H = n_heads * head_dim
    qkv = qkv_ref[0]                                   # (L, 3H) bf16
    mb = mb_ref[0].astype(jnp.float32)                 # (1, L) additive mask bias

    ctx_parts = []
    for h in range(n_heads):
        q = qkv[:, h * head_dim:(h + 1) * head_dim]            # (L, d) bf16
        k = qkv[:, H + h * head_dim:H + (h + 1) * head_dim]
        v = qkv[:, 2 * H + h * head_dim:2 * H + (h + 1) * head_dim]
        s = jnp.dot(q, k.T, preferred_element_type=jnp.float32) * scale + mb   # (L, L) f32
        s = s - jnp.max(s, axis=-1, keepdims=True)
        p = jnp.exp(s)
        p = p * pl.reciprocal(jnp.sum(p, axis=-1, keepdims=True), approx=True)
        ctx_parts.append(jnp.dot(p.astype(v.dtype), v, preferred_element_type=jnp.float32))
    o_ref[0] = jnp.concatenate(ctx_parts, axis=-1).astype(o_ref.dtype)         # (L, H)


def attention(qkv, mask_bias, scale):
    # qkv: (B, L, 3H) bf16 — fused, heads NOT pre-split (no JAX transposes).
    # mask_bias: (B, 1, L) f32 additive bias (0 or -1e4).
    B, L, H3 = qkv.shape
    return pl.pallas_call(
        functools.partial(_attn_kernel, scale=scale, n_heads=N_HEADS, head_dim=HEAD_DIM),
        out_shape=jax.ShapeDtypeStruct((B, L, HIDDEN), qkv.dtype),
        grid_spec=pltpu.PrefetchScalarGridSpec(
            num_scalar_prefetch=0,
            grid=(B,),
            in_specs=[
                pl.BlockSpec((1, L, H3), lambda b: (b, 0, 0)),
                pl.BlockSpec((1, 1, L), lambda b: (b, 0, 0)),
            ],
            out_specs=pl.BlockSpec((1, L, HIDDEN), lambda b: (b, 0, 0)),
        ),
        compiler_params=pltpu.CompilerParams(dimension_semantics=("parallel",)),
    )(qkv, mask_bias)


def _add_ln_kernel(x_ref, res_ref, g_ref, b_ref, o_ref, *, eps):
    x = x_ref[...].astype(jnp.float32) + res_ref[...].astype(jnp.float32)
    mean = jnp.mean(x, axis=-1, keepdims=True)
    c = x - mean
    var = jnp.mean(c * c, axis=-1, keepdims=True)
    y = c * jax.lax.rsqrt(var + eps)
    o_ref[...] = (y * g_ref[...] + b_ref[...]).astype(o_ref.dtype)


def add_layernorm(x, res, gamma, beta, eps=LN_EPS, out_dtype=jnp.bfloat16):
    """LayerNorm(x + res), row-tiled over M so it pipelines and shards across cores."""
    M, H = x.shape
    tm = _pick_tile(M, (512, 256, 128, 64, 32, 16, 8))
    return pl.pallas_call(
        functools.partial(_add_ln_kernel, eps=eps),
        out_shape=jax.ShapeDtypeStruct((M, H), out_dtype),
        grid_spec=pltpu.PrefetchScalarGridSpec(
            num_scalar_prefetch=0,
            grid=(M // tm,),
            in_specs=[
                pl.BlockSpec((tm, H), lambda i: (i, 0)),
                pl.BlockSpec((tm, H), lambda i: (i, 0)),
                pl.BlockSpec((1, H), lambda i: (0, 0)),
                pl.BlockSpec((1, H), lambda i: (0, 0)),
            ],
            out_specs=pl.BlockSpec((tm, H), lambda i: (i, 0)),
        ),
        compiler_params=pltpu.CompilerParams(dimension_semantics=("parallel",)),
    )(x, res, gamma.reshape(1, H).astype(jnp.float32), beta.reshape(1, H).astype(jnp.float32))


# ---------------------------- parameters ----------------------------

def init_params(key, num_classes):
    std = 0.02

    def norm(k, shape, dtype=jnp.bfloat16):
        return (jax.random.normal(k, shape) * std).astype(dtype)

    n_global = 8
    keys = jax.random.split(key, n_global + N_LAYERS)

    cls_w = norm(keys[4], (HIDDEN, num_classes), jnp.float32)
    cls_w_pad = jnp.zeros((HIDDEN, PAD_CLASSES), jnp.float32).at[:, :num_classes].set(cls_w)
    cls_b_pad = jnp.zeros((PAD_CLASSES,), jnp.float32)

    params = {
        "word_emb": norm(keys[0], (VOCAB, HIDDEN), jnp.float32),
        "pos_emb": norm(keys[1], (MAX_POS, HIDDEN), jnp.float32),
        "type_emb": norm(keys[2], (2, HIDDEN), jnp.float32),
        "emb_ln_g": jnp.ones((HIDDEN,), jnp.float32),
        "emb_ln_b": jnp.zeros((HIDDEN,), jnp.float32),
        "pool_w": norm(keys[3], (HIDDEN, HIDDEN)),
        "pool_b": jnp.zeros((HIDDEN,), jnp.float32),
        "cls_w_pad": cls_w_pad,
        "cls_b_pad": cls_b_pad,
        "layers": [],
    }
    for li in range(N_LAYERS):
        lk = jax.random.split(keys[n_global + li], 6)
        # fused QKV weight: (H, 3H) = [Wq | Wk | Wv]
        wqkv = jnp.concatenate(
            [norm(lk[0], (HIDDEN, HIDDEN)), norm(lk[1], (HIDDEN, HIDDEN)), norm(lk[2], (HIDDEN, HIDDEN))],
            axis=1)
        params["layers"].append({
            "wqkv": wqkv, "bqkv": jnp.zeros((3 * HIDDEN,), jnp.float32),
            "wo": norm(lk[3], (HIDDEN, HIDDEN)), "bo": jnp.zeros((HIDDEN,), jnp.float32),
            "ln1_g": jnp.ones((HIDDEN,), jnp.float32), "ln1_b": jnp.zeros((HIDDEN,), jnp.float32),
            "w1": norm(lk[4], (HIDDEN, INTERMEDIATE)), "b1": jnp.zeros((INTERMEDIATE,), jnp.float32),
            "w2": norm(lk[5], (INTERMEDIATE, HIDDEN)), "b2": jnp.zeros((HIDDEN,), jnp.float32),
            "ln2_g": jnp.ones((HIDDEN,), jnp.float32), "ln2_b": jnp.zeros((HIDDEN,), jnp.float32),
        })
    return params


# ---------------------------- forward (glue + kernel calls) ----------------------------

def bert_classifier_forward(params, inputs, mask):
    B, L = inputs.shape

    # --- embeddings: word + token-type(0) + position, then fused add+LayerNorm ---
    # TODO(synk): token_type_ids hard-coded to 0 (matches default single-segment input).
    word = jnp.take(params["word_emb"], inputs, axis=0)                         # (B, L, H)
    tok = params["type_emb"][0][None, None, :]                                  # (1, 1, H)
    pos = params["pos_emb"][:L]                                                 # (L, H)
    emb_a = (word + tok).reshape(B * L, HIDDEN)
    emb_b = jnp.broadcast_to(pos[None], (B, L, HIDDEN)).reshape(B * L, HIDDEN)
    h = add_layernorm(emb_a, emb_b, params["emb_ln_g"], params["emb_ln_b"])     # (B*L, H) bf16

    # --- extended attention mask -> additive bias per batch ---
    mask_bias = ((1.0 - mask.astype(jnp.float32)) * -10000.0)[:, None, :]       # (B, 1, L)
    scale = 1.0 / (HEAD_DIM ** 0.5)

    for lp in params["layers"]:
        qkv = dense(h, lp["wqkv"], lp["bqkv"])                                  # (B*L, 3H) fused
        ctx = attention(qkv.reshape(B, L, 3 * HIDDEN), mask_bias, scale)        # (B, L, H)
        attn_out = dense(ctx.reshape(B * L, HIDDEN), lp["wo"], lp["bo"])
        h = add_layernorm(attn_out, h, lp["ln1_g"], lp["ln1_b"])
        ff = dense(h, lp["w1"], lp["b1"], activation="gelu")
        ff = dense(ff, lp["w2"], lp["b2"])
        h = add_layernorm(ff, h, lp["ln2_g"], lp["ln2_b"])

    # --- pooled output = tanh(Linear(hidden of [CLS])) — BERT pooler (outputs[1]) ---
    cls = h.reshape(B, L, HIDDEN)[:, 0, :]                                      # (B, H)
    pooled = dense(cls, params["pool_w"], params["pool_b"], activation="tanh")

    # --- dropout(0.1): identity in eval-mode deterministic forward ---
    # TODO(synk): training-mode stochastic dropout not applied (deterministic forward).

    # --- final classification linear (lane-padded to 128, sliced back to C) ---
    logits = dense(pooled, params["cls_w_pad"], params["cls_b_pad"], out_dtype=jnp.float32)
    return logits[:, :NUM_CLASSES]


# ---------------------------- main ----------------------------

if __name__ == "__main__":
    B, L = 2, 8
    key = jax.random.PRNGKey(0)
    k_param, k_tok = jax.random.split(key)

    params = init_params(k_param, NUM_CLASSES)
    inputs = jax.random.randint(k_tok, (B, L), 0, VOCAB, dtype=jnp.int32)   # (B, L) token ids
    mask = jnp.ones((B, L), jnp.float32).at[1, 6:].set(0.0)                 # (B, L) binary attention mask

    logits = bert_classifier_forward(params, inputs, mask)                  # (B, C)
    logits = jax.block_until_ready(logits)
    assert logits.shape == (B, NUM_CLASSES)
    assert bool(jnp.all(jnp.isfinite(logits)))
    print("KERNEL_OK")
</pallas_src>

<mosaic_0001>
module attributes {stable_mosaic.version = 11 : i64} {
  func.func @_add_ln_kernel(%arg0: i32, %arg1: memref<16x768xf32, #tpu.memory_space<vmem>>, %arg2: memref<16x768xf32, #tpu.memory_space<vmem>>, %arg3: memref<1x768xf32, #tpu.memory_space<vmem>>, %arg4: memref<1x768xf32, #tpu.memory_space<vmem>>, %arg5: memref<16x768xbf16, #tpu.memory_space<vmem>>) attributes {dimension_semantics = [#tpu.dimension_semantics<parallel>], iteration_bounds = array<i64: 1>, scalar_prefetch = 0 : i64, scratch_operands = 0 : i64, tpu.core_type = #tpu.core_type<tc>, window_params = [{transform_indices = @transform_0, window_bounds = array<i64: 16, 768>}, {transform_indices = @transform_1, window_bounds = array<i64: 16, 768>}, {pipeline_mode = #tpu.pipeline_mode<synchronous>, transform_indices = @transform_2, window_bounds = array<i64: 1, 768>}, {pipeline_mode = #tpu.pipeline_mode<synchronous>, transform_indices = @transform_3, window_bounds = array<i64: 1, 768>}, {transform_indices = @transform_4, window_bounds = array<i64: 16, 768>}]} {
    %c0 = arith.constant 0 : index
    %c0_0 = arith.constant 0 : index
    %0 = vector.load %arg1[%c0, %c0_0] : memref<16x768xf32, #tpu.memory_space<vmem>>, vector<16x768xf32>
    %c0_1 = arith.constant 0 : index
    %c0_2 = arith.constant 0 : index
    %1 = vector.load %arg2[%c0_1, %c0_2] : memref<16x768xf32, #tpu.memory_space<vmem>>, vector<16x768xf32>
    %2 = arith.addf %0, %1 : vector<16x768xf32>
    %cst = arith.constant dense<0.000000e+00> : vector<16xf32>
    %3 = vector.multi_reduction <add>, %2, %cst [1] : vector<16x768xf32> to vector<16xf32>
    %4 = vector.shape_cast %3 : vector<16xf32> to vector<16x1xf32>
    %cst_3 = arith.constant 7.680000e+02 : f32
    %5 = vector.broadcast %cst_3 : f32 to vector<16x1xf32>
    %6 = arith.divf %4, %5 : vector<16x1xf32>
    %7 = vector.broadcast %6 : vector<16x1xf32> to vector<16x768xf32>
    %8 = arith.subf %2, %7 : vector<16x768xf32>
    %9 = arith.mulf %8, %8 : vector<16x768xf32>
    %cst_4 = arith.constant dense<0.000000e+00> : vector<16xf32>
    %10 = vector.multi_reduction <add>, %9, %cst_4 [1] : vector<16x768xf32> to vector<16xf32>
    %11 = vector.shape_cast %10 : vector<16xf32> to vector<16x1xf32>
    %cst_5 = arith.constant 7.680000e+02 : f32
    %12 = vector.broadcast %cst_5 : f32 to vector<16x1xf32>
    %13 = arith.divf %11, %12 : vector<16x1xf32>
    %cst_6 = arith.constant 9.99999996E-13 : f32
    %14 = vector.broadcast %cst_6 : f32 to vector<16x1xf32>
    %15 = arith.addf %13, %14 : vector<16x1xf32>
    %16 = math.rsqrt %15 : vector<16x1xf32>
    %17 = vector.broadcast %16 : vector<16x1xf32> to vector<16x768xf32>
    %18 = arith.mulf %8, %17 : vector<16x768xf32>
    %c0_7 = arith.constant 0 : index
    %c0_8 = arith.constant 0 : index
    %19 = vector.load %arg3[%c0_7, %c0_8] : memref<1x768xf32, #tpu.memory_space<vmem>>, vector<1x768xf32>
    %20 = vector.broadcast %19 : vector<1x768xf32> to vector<16x768xf32>
    %21 = arith.mulf %18, %20 : vector<16x768xf32>
    %c0_9 = arith.constant 0 : index
    %c0_10 = arith.constant 0 : index
    %22 = vector.load %arg4[%c0_9, %c0_10] : memref<1x768xf32, #tpu.memory_space<vmem>>, vector<1x768xf32>
    %23 = vector.broadcast %22 : vector<1x768xf32> to vector<16x768xf32>
    %24 = arith.addf %21, %23 : vector<16x768xf32>
    %25 = arith.truncf %24 : vector<16x768xf32> to vector<16x768xbf16>
    %c0_11 = arith.constant 0 : index
    %c0_12 = arith.constant 0 : index
    %26 = vector.load %arg5[%c0_11, %c0_12] : memref<16x768xbf16, #tpu.memory_space<vmem>>, vector<16x768xbf16>
    tpu.vector_store %arg5[%c0_11, %c0_12], %25 {strides = array<i32>} : memref<16x768xbf16, #tpu.memory_space<vmem>>, vector<16x768xbf16>,
    return
  }
  func.func @transform_0(%arg0: i32) -> (i32, i32) {
    %c0_i32 = arith.constant 0 : i32
    %c0_i32_0 = arith.constant 0 : i32
    return %arg0, %c0_i32 : i32, i32
  }
  func.func @transform_1(%arg0: i32) -> (i32, i32) {
    %c0_i32 = arith.constant 0 : i32
    %c0_i32_0 = arith.constant 0 : i32
    return %arg0, %c0_i32 : i32, i32
  }
  func.func @transform_2(%arg0: i32) -> (i32, i32) {
    %c0_i32 = arith.constant 0 : i32
    %c0_i32_0 = arith.constant 0 : i32
    %c0_i32_1 = arith.constant 0 : i32
    return %c0_i32, %c0_i32_0 : i32, i32
  }
  func.func @transform_3(%arg0: i32) -> (i32, i32) {
    %c0_i32 = arith.constant 0 : i32
    %c0_i32_0 = arith.constant 0 : i32
    %c0_i32_1 = arith.constant 0 : i32
    return %c0_i32, %c0_i32_0 : i32, i32
  }
  func.func @transform_4(%arg0: i32) -> (i32, i32) {
    %c0_i32 = arith.constant 0 : i32
    %c0_i32_0 = arith.constant 0 : i32
    return %arg0, %c0_i32 : i32, i32
  }
}

</mosaic_0001>

<llo_original>
// kernel: tpu_custom_call.1
$region0: #{tpu_custom_call.1}
  #allocation0 [shape = 'u32[]', space=smem, size = 0x4, offset = 0x4, fixed_abs, tag = 'smem constant byte address 0x4 - core index']
  #allocation1 [shape = 'u32[144,128]{1,0:T(1,128)}', space=vmem, size = 0x12000, scoped, tag = 'internal scratch']
  %s0 = inlined_call_operand.hbm [shape: f32[16,768], index: 0, kind: input, shape index: {}]
  %s1 = inlined_call_operand.hbm [shape: f32[16,768], index: 1, kind: input, shape index: {}]
  %s2 = inlined_call_operand.hbm [shape: f32[1,768], index: 2, kind: input, shape index: {}]
  %s3 = inlined_call_operand.hbm [shape: f32[1,768], index: 3, kind: input, shape index: {}]
  %s4 = inlined_call_operand.hbm [shape: bf16[16,768], index: 4, kind: output, shape index: {}]
  %s5 = sld [smem:[#allocation0]]
  $region42: #{tpu_custom_call.1} parent=0
    _
  %s7 = ssub.s32 1, %s5
  %s8 = scalar_select 0, %s7, %s5
  $region1: #{tpu_custom_call.1} parent=0
    #allocation2 [shape = 'u8[49152]{0}', space=vmem, size = 0xc000, scoped, tag = 'input window, operand 0, single buffered']
    #allocation3 [shape = 's32[1]{0}', space=sflag, size = 0x4, scoped, tag = 'scoped memory for tpu_custom_call.1']
    #allocation4 [shape = 's32[1]{0}', space=sflag, size = 0x4, scoped, tag = 'scoped memory for tpu_custom_call.1']
    #allocation5 [shape = 'u8[49152]{0}', space=vmem, size = 0xc000, scoped, tag = 'input window, operand 1, single buffered']
    #allocation6 [shape = 's32[1]{0}', space=sflag, size = 0x4, scoped, tag = 'scoped memory for tpu_custom_call.1']
    #allocation7 [shape = 'u8[3072]{0}', space=vmem, size = 0xc00, scoped, tag = 'input window, operand 2, single buffered']
    #allocation8 [shape = 'u8[3072]{0}', space=vmem, size = 0xc00, scoped, tag = 'input window, operand 3, single buffered']
    #allocation9 [shape = 's32[1]{0}', space=sflag, size = 0x4, scoped, tag = 'scoped memory for tpu_custom_call.1']
    #allocation10 [shape = 'u8[24576]{0}', space=vmem, size = 0x6000, scoped, tag = 'output window, operand 0, single buffered']
    %9 = vsyncpa [#allocation3], 0
    %10 = vsyncpa [#allocation6], 0
    %11 = vsyncpa [#allocation9], 0
    %12 = vsyncpa [#allocation4], 0
    // Predicated region
    $region2: #{tpu_custom_call.1} parent=1 // pred_check
      _
    $region3: #{tpu_custom_call.1} parent=1 // pred_check_branch
      %14 = sbr.rel (0) target = $region5
    $region4: #{tpu_custom_call.1} parent=1 // pred_region
      %s16 = ssub.s32 1536, 1536
      %17 = vsyncadd [#allocation3], %s16
      %s18 = sshll.u32 [#allocation2], 4
      %s19 = int_to_ptr.vmem [resolvable:$true] %s18
      %24 = dma.hbm_to_vmem [thread:$0]  %s0, 1536, %s19, [#allocation3], 768, 768, 48
    $region5: #{tpu_custom_call.1} parent=1 // pred_fallthru
      _
    // Predicated region
    $region6: #{tpu_custom_call.1} parent=1 // pred_check
      _
    $region7: #{tpu_custom_call.1} parent=1 // pred_check_branch
      %26 = sbr.rel (0) target = $region9
    $region8: #{tpu_custom_call.1} parent=1 // pred_region
      %s28 = ssub.s32 1536, 1536
      %29 = vsyncadd [#allocation6], %s28
      %s30 = sshll.u32 [#allocation5], 4
      %s31 = int_to_ptr.vmem [resolvable:$true] %s30
      %36 = dma.hbm_to_vmem [thread:$0]  %s1, 1536, %s31, [#allocation6], 768, 768, 48
    $region9: #{tpu_custom_call.1} parent=1 // pred_fallthru
      _
    // Predicated region
    $region10: #{tpu_custom_call.1} parent=1 // pred_check
      _
    $region11: #{tpu_custom_call.1} parent=1 // pred_check_branch
      %38 = sbr.rel (0) target = $region13
    $region12: #{tpu_custom_call.1} parent=1 // pred_region
      %s40 = ssub.s32 96, 96
      %41 = vsyncadd [#allocation6], %s40
      %s43 = sshll.u32 [#allocation7], 4
      %s44 = int_to_ptr.vmem [resolvable:$true] %s43
      %46 = dma.hbm_to_vmem [thread:$0]  %s2, 96, %s44, [#allocation6]
    $region13: #{tpu_custom_call.1} parent=1 // pred_fallthru
      _
    // Predicated region
    $region14: #{tpu_custom_call.1} parent=1 // pred_check
      _
    $region15: #{tpu_custom_call.1} parent=1 // pred_check_branch
      %48 = sbr.rel (0) target = $region17
    $region16: #{tpu_custom_call.1} parent=1 // pred_region
      %s50 = ssub.s32 96, 96
      %51 = vsyncadd [#allocation9], %s50
      %s53 = sshll.u32 [#allocation8], 4
      %s54 = int_to_ptr.vmem [resolvable:$true] %s53
      %56 = dma.hbm_to_vmem [thread:$0]  %s3, 96, %s54, [#allocation9]
    $region17: #{tpu_custom_call.1} parent=1 // pred_fallthru
      _
    // Predicated region
    $region18: #{tpu_custom_call.1} parent=1 // pred_check
      _
    $region19: #{tpu_custom_call.1} parent=1 // pred_check_branch
      %58 = sbr.rel (0) target = $region21
    $region20: #{tpu_custom_call.1} parent=1 // pred_region
      %59 = dma.done [#allocation3], 1536
    $region21: #{tpu_custom_call.1} parent=1 // pred_fallthru
      _
    // Predicated region
    $region22: #{tpu_custom_call.1} parent=1 // pred_check
      _
    $region23: #{tpu_custom_call.1} parent=1 // pred_check_branch
      %61 = sbr.rel (0) target = $region25
    $region24: #{tpu_custom_call.1} parent=1 // pred_region
      %62 = dma.done [#allocation6], 1536
    $region25: #{tpu_custom_call.1} parent=1 // pred_fallthru
      _
    // Predicated region
    $region26: #{tpu_custom_call.1} parent=1 // pred_check
      _
    $region27: #{tpu_custom_call.1} parent=1 // pred_check_branch
      %64 = sbr.rel (0) target = $region29
    $region28: #{tpu_custom_call.1} parent=1 // pred_region
      %65 = dma.done [#allocation6], 96
    $region29: #{tpu_custom_call.1} parent=1 // pred_fallthru
      _
    // Predicated region
    $region30: #{tpu_custom_call.1} parent=1 // pred_check
      _
    $region31: #{tpu_custom_call.1} parent=1 // pred_check_branch
      %67 = sbr.rel (0) target = $region33
    $region32: #{tpu_custom_call.1} parent=1 // pred_region
      %68 = dma.done [#allocation9], 96
    $region33: #{tpu_custom_call.1} parent=1 // pred_fallthru
      _
    %v69 = vld [vmem:[#allocation2] sm:$0xff]
    %v70 = vld [vmem:[#allocation2 + $0x8] sm:$0xff]
    %v71 = vld [vmem:[#allocation2 + $0x10] sm:$0xff]
    %v72 = vld [vmem:[#allocation2 + $0x18] sm:$0xff]
    %v73 = vld [vmem:[#allocation2 + $0x20] sm:$0xff]
    %v74 = vld [vmem:[#allocation2 + $0x28] sm:$0xff]
    %v75 = vld [vmem:[#allocation2 + $0x30] sm:$0xff]
    %v76 = vld [vmem:[#allocation2 + $0x38] sm:$0xff]
    %v77 = vld [vmem:[#allocation2 + $0x40] sm:$0xff]
    %v78 = vld [vmem:[#allocation2 + $0x48] sm:$0xff]
    %v79 = vld [vmem:[#allocation2 + $0x50] sm:$0xff]
    %v80 = vld [vmem:[#allocation2 + $0x58] sm:$0xff]
    %v81 = vld [vmem:[#allocation5] sm:$0xff]
    %v82 = vld [vmem:[#allocation5 + $0x8] sm:$0xff]
    %v83 = vld [vmem:[#allocation5 + $0x10] sm:$0xff]
    %v84 = vld [vmem:[#allocation5 + $0x18] sm:$0xff]
    %v85 = vld [vmem:[#allocation5 + $0x20] sm:$0xff]
    %v86 = vld [vmem:[#allocation5 + $0x28] sm:$0xff]
    %v87 = vld [vmem:[#allocation5 + $0x30] sm:$0xff]
    %v88 = vld [vmem:[#allocation5 + $0x38] sm:$0xff]
    %v89 = vld [vmem:[#allocation5 + $0x40] sm:$0xff]
    %v90 = vld [vmem:[#allocation5 + $0x48] sm:$0xff]
    %v91 = vld [vmem:[#allocation5 + $0x50] sm:$0xff]
    %v92 = vld [vmem:[#allocation5 + $0x58] sm:$0xff]
    %v93 = vadd.f32 %v69, %v81
    %v94 = vadd.f32 %v70, %v82
    %v95 = vadd.f32 %v71, %v83
    %v96 = vadd.f32 %v72, %v84
    %v97 = vadd.f32 %v73, %v85
    %v98 = vadd.f32 %v74, %v86
    %v99 = vadd.f32 %v75, %v87
    %v100 = vadd.f32 %v76, %v88
    %v101 = vadd.f32 %v77, %v89
    %v102 = vadd.f32 %v78, %v90
    %v103 = vadd.f32 %v79, %v91
    %v104 = vadd.f32 %v80, %v92
    %v105 = vadd.f32 %v93, %v94
    %v106 = vadd.f32 %v105, %v95
    %v107 = vadd.f32 %v106, %v96
    %v108 = vadd.f32 %v107, %v97
    %v109 = vadd.f32 %v108, %v98
    %110 = vadd.xlane.f32.xlu0 %v109
    %v111 = vpop.xlane.xlu0 %110
    %v112 = vadd.f32 %v99, %v100
    %v113 = vadd.f32 %v112, %v101
    %v114 = vadd.f32 %v113, %v102
    %v115 = vadd.f32 %v114, %v103
    %v116 = vadd.f32 %v115, %v104
    %117 = vadd.xlane.f32.xlu0 %v116
    %v118 = vpop.xlane.xlu0 %117
    %v119 = vrcp.pop 768.0
    %v120 = vmul.f32 %v111, %v119
    %v121 = vmul.f32 %v118, %v119
    %v122 = vsub.f32 %v93, %v120
    %v123 = vsub.f32 %v94, %v120
    %v124 = vsub.f32 %v95, %v120
    %v125 = vsub.f32 %v96, %v120
    %v126 = vsub.f32 %v97, %v120
    %v127 = vsub.f32 %v98, %v120
    %v128 = vsub.f32 %v99, %v121
    %v129 = vsub.f32 %v100, %v121
    %v130 = vsub.f32 %v101, %v121
    %v131 = vsub.f32 %v102, %v121
    %v132 = vsub.f32 %v103, %v121
    %v133 = vsub.f32 %v104, %v121
    %v134 = vmul.f32 %v122, %v122
    %v135 = vmul.f32 %v123, %v123
    %v136 = vmul.f32 %v124, %v124
    %v137 = vmul.f32 %v125, %v125
    %v138 = vmul.f32 %v126, %v126
    %v139 = vmul.f32 %v127, %v127
    %v140 = vmul.f32 %v128, %v128
    %v141 = vmul.f32 %v129, %v129
    %v142 = vmul.f32 %v130, %v130
    %v143 = vmul.f32 %v131, %v131
    %v144 = vmul.f32 %v132, %v132
    %v145 = vmul.f32 %v133, %v133
    %v146 = vadd.f32 %v134, %v135
    %v147 = vadd.f32 %v146, %v136
    %v148 = vadd.f32 %v147, %v137
    %v149 = vadd.f32 %v148, %v138
    %v150 = vadd.f32 %v149, %v139
    %151 = vadd.xlane.f32.xlu0 %v150
    %v152 = vpop.xlane.xlu0 %151
    %v153 = vadd.f32 %v140, %v141
    %v154 = vadd.f32 %v153, %v142
    %v155 = vadd.f32 %v154, %v143
    %v156 = vadd.f32 %v155, %v144
    %v157 = vadd.f32 %v156, %v145
    %158 = vadd.xlane.f32.xlu0 %v157
    %v159 = vpop.xlane.xlu0 %158
    %v160 = vmul.f32 %v152, %v119
    %v161 = vmul.f32 %v159, %v119
    %v162 = vadd.f32 %v160, 1e-12
    %v163 = vadd.f32 %v161, 1e-12
    %v164 = vrsqrt.pop %v162
    %v165 = vrsqrt.pop %v163
    %v166 = vmul.f32 %v122, %v164
    %v167 = vmul.f32 %v123, %v164
    %v168 = vmul.f32 %v124, %v164
    %v169 = vmul.f32 %v125, %v164
    %v170 = vmul.f32 %v126, %v164
    %v171 = vmul.f32 %v127, %v164
    %v172 = vmul.f32 %v128, %v165
    %v173 = vmul.f32 %v129, %v165
    %v174 = vmul.f32 %v130, %v165
    %v175 = vmul.f32 %v131, %v165
    %v176 = vmul.f32 %v132, %v165
    %v177 = vmul.f32 %v133, %v165
    %v178 = vld [vmem:[#allocation7] sm:$0x3f]
    %v180 = vlaneseq
    %v181 = vshrl.u32 %v180, 7
    %v182 = vsub.s32 0, %v181
    %v183 = vrot.slane %v178, %v182
    %v184 = vlaneseq
    %v185 = vshrl.u32 %v184, 7
    %v186 = vsub.s32 1, %v185
    %v187 = vrot.slane %v178, %v186
    %v188 = vlaneseq
    %v189 = vshrl.u32 %v188, 7
    %v190 = vsub.s32 2, %v189
    %v191 = vrot.slane %v178, %v190
    %v192 = vlaneseq
    %v193 = vshrl.u32 %v192, 7
    %v194 = vsub.s32 3, %v193
    %v195 = vrot.slane %v178, %v194
    %v196 = vlaneseq
    %v197 = vshrl.u32 %v196, 7
    %v198 = vsub.s32 4, %v197
    %v199 = vrot.slane %v178, %v198
    %v200 = vlaneseq
    %v201 = vshrl.u32 %v200, 7
    %v202 = vsub.s32 5, %v201
    %v203 = vrot.slane %v178, %v202
    %v210 = vmul.f32 %v166, %v183
    %v211 = vmul.f32 %v167, %v187
    %v212 = vmul.f32 %v168, %v191
    %v213 = vmul.f32 %v169, %v195
    %v214 = vmul.f32 %v170, %v199
    %v215 = vmul.f32 %v171, %v203
    %v216 = vmul.f32 %v172, %v183
    %v217 = vmul.f32 %v173, %v187
    %v218 = vmul.f32 %v174, %v191
    %v219 = vmul.f32 %v175, %v195
    %v220 = vmul.f32 %v176, %v199
    %v221 = vmul.f32 %v177, %v203
    %v222 = vld [vmem:[#allocation8] sm:$0x3f]
    %v224 = vlaneseq
    %v225 = vshrl.u32 %v224, 7
    %v226 = vsub.s32 0, %v225
    %v227 = vrot.slane %v222, %v226
    %v228 = vlaneseq
    %v229 = vshrl.u32 %v228, 7
    %v230 = vsub.s32 1, %v229
    %v231 = vrot.slane %v222, %v230
    %v232 = vlaneseq
    %v233 = vshrl.u32 %v232, 7
    %v234 = vsub.s32 2, %v233
    %v235 = vrot.slane %v222, %v234
    %v236 = vlaneseq
    %v237 = vshrl.u32 %v236, 7
    %v238 = vsub.s32 3, %v237
    %v239 = vrot.slane %v222, %v238
    %v240 = vlaneseq
    %v241 = vshrl.u32 %v240, 7
    %v242 = vsub.s32 4, %v241
    %v243 = vrot.slane %v222, %v242
    %v244 = vlaneseq
    %v245 = vshrl.u32 %v244, 7
    %v246 = vsub.s32 5, %v245
    %v247 = vrot.slane %v222, %v246
    %v254 = vadd.f32 %v210, %v227
    %v255 = vadd.f32 %v211, %v231
    %v256 = vadd.f32 %v212, %v235
    %v257 = vadd.f32 %v213, %v239
    %v258 = vadd.f32 %v214, %v243
    %v259 = vadd.f32 %v215, %v247
    %v260 = vadd.f32 %v216, %v227
    %v261 = vadd.f32 %v217, %v231
    %v262 = vadd.f32 %v218, %v235
    %v263 = vadd.f32 %v219, %v239
    %v264 = vadd.f32 %v220, %v243
    %v265 = vadd.f32 %v221, %v247
    %v266 = vpack.c.bf16 %v260, %v254
    %v267 = vpack.c.bf16 %v261, %v255
    %v268 = vpack.c.bf16 %v262, %v256
    %v269 = vpack.c.bf16 %v263, %v257
    %v270 = vpack.c.bf16 %v264, %v258
    %v271 = vpack.c.bf16 %v265, %v259
    %v278 = vunpack.c.l.b16 %v266
    %v279 = vunpack.c.l.b16 %v267
    %v280 = vunpack.c.l.b16 %v268
    %v281 = vunpack.c.l.b16 %v269
    %v282 = vunpack.c.l.b16 %v270
    %v283 = vunpack.c.l.b16 %v271
    %v284 = vunpack.c.h.b16 %v266
    %v285 = vunpack.c.h.b16 %v267
    %v286 = vunpack.c.h.b16 %v268
    %v287 = vunpack.c.h.b16 %v269
    %v288 = vunpack.c.h.b16 %v270
    %v289 = vunpack.c.h.b16 %v271
    %v290 = vpack.c.b16 %v279, %v278
    %v291 = vpack.c.b16 %v281, %v280
    %v292 = vpack.c.b16 %v283, %v282
    %v293 = vpack.c.b16 %v285, %v284
    %v294 = vpack.c.b16 %v287, %v286
    %v295 = vpack.c.b16 %v289, %v288
    %302 = vst [vmem:[#allocation10] sm:$0xff] %v290
    %303 = vst [vmem:[#allocation10 + $0x8] sm:$0xff] %v291
    %304 = vst [vmem:[#allocation10 + $0x10] sm:$0xff] %v292
    %305 = vst [vmem:[#allocation10 + $0x18] sm:$0xff] %v293
    %306 = vst [vmem:[#allocation10 + $0x20] sm:$0xff] %v294
    %307 = vst [vmem:[#allocation10 + $0x28] sm:$0xff] %v295
    // Predicated region
    $region34: #{tpu_custom_call.1} parent=1 // pred_check
      _
    $region35: #{tpu_custom_call.1} parent=1 // pred_check_branch
      %309 = sbr.rel (0) target = $region37
    $region36: #{tpu_custom_call.1} parent=1 // pred_region
      %s311 = ssub.s32 768, 768
      %312 = vsyncadd [#allocation4], %s311
      %s313 = sshll.u32 [#allocation10], 4
      %s314 = int_to_ptr.vmem [resolvable:$true] %s313
      %319 = dma.vmem_to_hbm [thread:$0]  %s314, 768, %s4, [#allocation4], 384, 384, 24
    $region37: #{tpu_custom_call.1} parent=1 // pred_fallthru
      _
    // Predicated region
    $region38: #{tpu_custom_call.1} parent=1 // pred_check
      _
    $region39: #{tpu_custom_call.1} parent=1 // pred_check_branch
      %321 = sbr.rel (0) target = $region41
    $region40: #{tpu_custom_call.1} parent=1 // pred_region
      %322 = dma.done [#allocation4], 768
    $region41: #{tpu_custom_call.1} parent=1 // pred_fallthru
      _
    %323 = vsyncpa [#allocation3], 1
    %324 = vsyncpa [#allocation6], 1
    %325 = vsyncpa [#allocation9], 1
    %326 = vsyncpa [#allocation4], 1

</llo_original>
